<compile_context>
chip_gen: v5e
topology: v5e:2x2
jax: 0.10.0
libtpu: 0.0.40
codegen_flags: <defaults>
</compile_context>

<pallas_src>
import jax
import jax.numpy as jnp
from jax.experimental import pallas as pl
from jax.experimental.pallas import tpu as pltpu

BN_EPS = 1e-5


def _vnet_kernel(t_ref, s_ref, bn_t_ref, bn_s_ref,
                 w1t_ref, w1s_ref, b1_ref, w2_ref, b2_ref,
                 w3_ref, b3_ref, o_ref):
    t = t_ref[...]                                   # (tb, 1) f32 time column
    s = s_ref[...]                                   # (tb, S) f32 state columns

    # --- BatchNorm1d normalization with global (wrapper-computed) stats. ----
    # gamma/beta are already folded into w1*/b1 by prepare_params().
    tn = (t - bn_t_ref[0, 0]) * bn_t_ref[0, 1]       # (tb, 1)
    sn = (s - bn_s_ref[0:1, :]) * bn_s_ref[1:2, :]   # (tb, S)

    # --- Linear(F, 256) + ReLU: time row via VPU outer product, state block
    #     via bf16 MXU matmul (f32 accumulation). ----------------------------
    h = tn * w1t_ref[...]                                              # (tb,1)*(1,H)
    h = h + jnp.dot(sn.astype(jnp.bfloat16), w1s_ref[...],
                    preferred_element_type=jnp.float32)
    h = jnp.maximum(h + b1_ref[...], 0.0)

    # --- Linear(256, 256) + ReLU (bf16 MXU operands, f32 accumulation). -----
    h = jnp.dot(h.astype(jnp.bfloat16), w2_ref[...],
                preferred_element_type=jnp.float32) + b2_ref[...]
    h = jnp.maximum(h, 0.0)

    # --- Dropout(p=0.5) replaced by Identity (dropout=False). ---------------

    # --- Linear(256, 1), lane-dense: out_row = w3 @ h^T -> (1, tb). ---------
    res = jax.lax.dot_general(
        w3_ref[...], h,
        dimension_numbers=(((1,), (1,)), ((), ())),   # contract H on both
        preferred_element_type=jnp.float32)           # (1, tb)
    o_ref[...] = (res + b3_ref[0, 0]).astype(o_ref.dtype)


def prepare_params(params):
    """One-time parameter prep (outside the per-step path).

    Folds the BatchNorm affine (gamma, beta) into the first Linear layer,
    splits w1 into its time row / state rows (so the concat is fused away),
    casts the MXU weight operands (w1s, w2) to bf16, and reshapes w3/b3.
    """
    gamma_col = params["gamma"].reshape(-1, 1)                 # (F, 1)
    w1 = params["w1"]                                          # (F, H) f32
    w1_fused = gamma_col * w1                                  # fold gamma
    b1_fused = params["b1"] + params["beta"] @ w1              # fold beta
    return dict(
        w1t=w1_fused[0:1, :],                                  # (1, H) f32  (time row, VPU)
        w1s=w1_fused[1:, :].astype(jnp.bfloat16),              # (S, H) bf16 (MXU)
        b1=b1_fused,                                           # (1, H) f32
        w2=params["w2"].astype(jnp.bfloat16),                  # (H, H) bf16 (halves DMA)
        b2=params["b2"],                                       # (1, H) f32
        w3=params["w3"].reshape(1, -1),                        # (1, H) f32 row
        b3=params["b3"].reshape(1, 1),                         # (1, 1) f32 -> SMEM scalar
    )


def _pick_tile_b(B):
    # Largest batch tile that amortizes the ~0.35 us/grid-step overhead while
    # keeping the (8,128)-divisibility rule; small batches use a single tile.
    for tb in (512, 256, 128):
        if B > tb and B % tb == 0:
            return tb
    return B


def vnetwork_forward(time_steps, states, prepared):
    """time_steps: (B, 1) f32, states: (B, state_dim) f32 -> (B,) f32."""
    B = time_steps.shape[0]
    S = states.shape[1]
    H = prepared["b1"].shape[1]

    # --- Global batch statistics (training-mode BN, biased variance), ------
    # computed wrapper-side so the batch grid cannot change semantics.
    mt = jnp.mean(time_steps, axis=0, keepdims=True)
    vt = jnp.mean((time_steps - mt) ** 2, axis=0, keepdims=True)
    bn_t = jnp.concatenate([mt, jax.lax.rsqrt(vt + BN_EPS)], axis=1)   # (1, 2)

    ms = jnp.mean(states, axis=0, keepdims=True)
    vs = jnp.mean((states - ms) ** 2, axis=0, keepdims=True)
    bn_s = jnp.concatenate([ms, jax.lax.rsqrt(vs + BN_EPS)], axis=0)   # (2, S)

    tile_b = _pick_tile_b(B)
    nb = B // tile_b

    smem = pl.BlockSpec(memory_space=pltpu.MemorySpace.SMEM)
    const2d = lambda i: (0, 0)   # weights/stats: VMEM-resident, never re-DMA'd

    args = (time_steps, states, bn_t, bn_s,
            prepared["w1t"], prepared["w1s"], prepared["b1"],
            prepared["w2"], prepared["b2"], prepared["w3"], prepared["b3"])
    bytes_accessed = sum(int(a.size) * a.dtype.itemsize for a in args) + B * 4
    flops = 2 * B * ((S + 1) * H + H * H + H)
    cost = pl.CostEstimate(flops=flops, transcendentals=0,
                           bytes_accessed=bytes_accessed)

    out_row = pl.pallas_call(
        _vnet_kernel,
        out_shape=jax.ShapeDtypeStruct((1, B), jnp.float32),
        grid_spec=pltpu.PrefetchScalarGridSpec(
            num_scalar_prefetch=0,
            grid=(nb,),
            in_specs=[
                pl.BlockSpec((tile_b, 1), lambda i: (i, 0)),   # time tile
                pl.BlockSpec((tile_b, S), lambda i: (i, 0)),   # state tile
                smem,                                          # bn_t [mean, inv]
                pl.BlockSpec((2, S), const2d),                 # bn_s [mean; inv]
                pl.BlockSpec((1, H), const2d),                 # w1t (f32)
                pl.BlockSpec((S, H), const2d),                 # w1s (bf16)
                pl.BlockSpec((1, H), const2d),                 # b1
                pl.BlockSpec((H, H), const2d),                 # w2 (bf16)
                pl.BlockSpec((1, H), const2d),                 # b2
                pl.BlockSpec((1, H), const2d),                 # w3
                smem,                                          # b3 scalar
            ],
            out_specs=pl.BlockSpec((1, tile_b), lambda i: (0, i)),  # lane-dense row
        ),
        compiler_params=pltpu.CompilerParams(
            dimension_semantics=("parallel",)),
        cost_estimate=cost,
    )(*args)
    # torch.nn.Flatten(-2): (1, B) row -> (B,)
    return out_row.reshape(B)


def init_params(key, state_dim, hidden=256):
    F = state_dim + 1
    ks = jax.random.split(key, 8)

    def lin(kw, kb, fan_in, fan_out):
        bound = 1.0 / jnp.sqrt(fan_in)
        w = jax.random.uniform(kw, (fan_in, fan_out), jnp.float32, -bound, bound)
        b = jax.random.uniform(kb, (1, fan_out), jnp.float32, -bound, bound)
        return w, b

    w1, b1 = lin(ks[0], ks[1], F, hidden)
    w2, b2 = lin(ks[2], ks[3], hidden, hidden)
    w3, b3 = lin(ks[4], ks[5], hidden, 1)
    # BatchNorm affine params (torch default: weight=1, bias=0), perturbed
    # deterministically so the test exercises the affine fold.
    gamma = 1.0 + 0.1 * jax.random.normal(ks[6], (1, F), jnp.float32)
    beta = 0.1 * jax.random.normal(ks[7], (1, F), jnp.float32)
    return dict(gamma=gamma, beta=beta, w1=w1, b1=b1, w2=w2, b2=b2, w3=w3, b3=b3)


def vnetwork_reference_f32(time_steps, states, params):
    """Pure-JAX full-f32 reference of the module's forward pass."""
    x = jnp.concatenate([time_steps, states], axis=-1)
    mean = jnp.mean(x, axis=0, keepdims=True)
    var = jnp.mean((x - mean) ** 2, axis=0, keepdims=True)
    h = (x - mean) / jnp.sqrt(var + BN_EPS) * params["gamma"] + params["beta"]
    h = jnp.maximum(h @ params["w1"] + params["b1"], 0.0)
    h = jnp.maximum(h @ params["w2"] + params["b2"], 0.0)
    h = h @ params["w3"] + params["b3"]
    return h.reshape(-1)


def vnetwork_reference_mixed(time_steps, states, prepared):
    """Reference mirroring the kernel's precision choices (bf16 w1s/w2 MXU
    operands, f32 accumulation/elementwise, BN fold + fused concat)."""
    mt = jnp.mean(time_steps, axis=0, keepdims=True)
    vt = jnp.mean((time_steps - mt) ** 2, axis=0, keepdims=True)
    tn = (time_steps - mt) * jax.lax.rsqrt(vt + BN_EPS)
    ms = jnp.mean(states, axis=0, keepdims=True)
    vs = jnp.mean((states - ms) ** 2, axis=0, keepdims=True)
    sn = (states - ms) * jax.lax.rsqrt(vs + BN_EPS)

    h = tn * prepared["w1t"] + jnp.dot(sn.astype(jnp.bfloat16), prepared["w1s"],
                                       preferred_element_type=jnp.float32)
    h = jnp.maximum(h + prepared["b1"], 0.0)
    h = jnp.dot(h.astype(jnp.bfloat16), prepared["w2"],
                preferred_element_type=jnp.float32) + prepared["b2"]
    h = jnp.maximum(h, 0.0)
    h = jnp.dot(h, prepared["w3"].T,
                preferred_element_type=jnp.float32) + prepared["b3"]
    return h.reshape(-1)


if __name__ == "__main__":
    key = jax.random.PRNGKey(0)
    k_ts, k_st, k_p = jax.random.split(key, 3)

    batch = 8
    state_dim = 7          # env.observation_space.shape[0]

    time_steps = jax.random.uniform(k_ts, (batch, 1), jnp.float32)
    states = jax.random.normal(k_st, (batch, state_dim), jnp.float32)
    params = init_params(k_p, state_dim)
    prepared = prepare_params(params)      # one-time fold / cast / split

    fwd = jax.jit(vnetwork_forward)
    y = fwd(time_steps, states, prepared)
    jax.block_until_ready(y)
    assert y.shape == (batch,)

    # Tight check vs. a reference with identical precision choices.
    y_mixed = vnetwork_reference_mixed(time_steps, states, prepared)
    assert jnp.allclose(y, y_mixed, atol=1e-3, rtol=1e-3), (y, y_mixed)

    # Loose check vs. the full-f32 module semantics (delta: bf16 w1s/w2 operands).
    y_f32 = vnetwork_reference_f32(time_steps, states, params)
    assert jnp.allclose(y, y_f32, atol=3e-2, rtol=3e-2), (y, y_f32)

    print("KERNEL_OK")
</pallas_src>

<mosaic_0001>
module attributes {stable_mosaic.version = 11 : i64} {
  func.func @_vnet_kernel(%arg0: i32, %arg1: memref<8x1xf32, #tpu.memory_space<vmem>>, %arg2: memref<8x7xf32, #tpu.memory_space<vmem>>, %arg3: memref<1x2xf32, #tpu.memory_space<smem>>, %arg4: memref<2x7xf32, #tpu.memory_space<vmem>>, %arg5: memref<1x256xf32, #tpu.memory_space<vmem>>, %arg6: memref<7x256xbf16, #tpu.memory_space<vmem>>, %arg7: memref<1x256xf32, #tpu.memory_space<vmem>>, %arg8: memref<256x256xbf16, #tpu.memory_space<vmem>>, %arg9: memref<1x256xf32, #tpu.memory_space<vmem>>, %arg10: memref<1x256xf32, #tpu.memory_space<vmem>>, %arg11: memref<1x1xf32, #tpu.memory_space<smem>>, %arg12: memref<1x8xf32, #tpu.memory_space<vmem>>) attributes {dimension_semantics = [#tpu.dimension_semantics<parallel>], iteration_bounds = array<i64: 1>, scalar_prefetch = 0 : i64, scratch_operands = 0 : i64, tpu.core_type = #tpu.core_type<tc>, window_params = [{transform_indices = @transform_0, window_bounds = array<i64: 8, 1>}, {transform_indices = @transform_1, window_bounds = array<i64: 8, 7>}, {transform_indices = @transform_2, window_bounds = array<i64: 1, 2>}, {pipeline_mode = #tpu.pipeline_mode<synchronous>, transform_indices = @transform_3, window_bounds = array<i64: 2, 7>}, {pipeline_mode = #tpu.pipeline_mode<synchronous>, transform_indices = @transform_4, window_bounds = array<i64: 1, 256>}, {pipeline_mode = #tpu.pipeline_mode<synchronous>, transform_indices = @transform_5, window_bounds = array<i64: 7, 256>}, {pipeline_mode = #tpu.pipeline_mode<synchronous>, transform_indices = @transform_6, window_bounds = array<i64: 1, 256>}, {pipeline_mode = #tpu.pipeline_mode<synchronous>, transform_indices = @transform_7, window_bounds = array<i64: 256, 256>}, {pipeline_mode = #tpu.pipeline_mode<synchronous>, transform_indices = @transform_8, window_bounds = array<i64: 1, 256>}, {pipeline_mode = #tpu.pipeline_mode<synchronous>, transform_indices = @transform_9, window_bounds = array<i64: 1, 256>}, {transform_indices = @transform_10, window_bounds = array<i64: 1, 1>}, {transform_indices = @transform_11, window_bounds = array<i64: 1, 8>}]} {
    %c0 = arith.constant 0 : index
    %c0_0 = arith.constant 0 : index
    %0 = vector.load %arg1[%c0, %c0_0] : memref<8x1xf32, #tpu.memory_space<vmem>>, vector<8x1xf32>
    %c0_1 = arith.constant 0 : index
    %c0_2 = arith.constant 0 : index
    %1 = vector.load %arg2[%c0_1, %c0_2] : memref<8x7xf32, #tpu.memory_space<vmem>>, vector<8x7xf32>
    %c0_3 = arith.constant 0 : index
    %c0_4 = arith.constant 0 : index
    %2 = memref.load %arg3[%c0_3, %c0_4] : memref<1x2xf32, #tpu.memory_space<smem>>
    %3 = vector.broadcast %2 : f32 to vector<8x1xf32>
    %4 = arith.subf %0, %3 : vector<8x1xf32>
    %c0_5 = arith.constant 0 : index
    %c1 = arith.constant 1 : index
    %5 = memref.load %arg3[%c0_5, %c1] : memref<1x2xf32, #tpu.memory_space<smem>>
    %6 = vector.broadcast %5 : f32 to vector<8x1xf32>
    %7 = arith.mulf %4, %6 : vector<8x1xf32>
    %c0_6 = arith.constant 0 : index
    %c0_7 = arith.constant 0 : index
    %8 = vector.load %arg4[%c0_6, %c0_7] : memref<2x7xf32, #tpu.memory_space<vmem>>, vector<1x7xf32>
    %9 = vector.broadcast %8 : vector<1x7xf32> to vector<8x7xf32>
    %10 = arith.subf %1, %9 : vector<8x7xf32>
    %c1_8 = arith.constant 1 : index
    %c0_9 = arith.constant 0 : index
    %11 = vector.load %arg4[%c1_8, %c0_9] : memref<2x7xf32, #tpu.memory_space<vmem>>, vector<1x7xf32>
    %12 = vector.broadcast %11 : vector<1x7xf32> to vector<8x7xf32>
    %13 = arith.mulf %10, %12 : vector<8x7xf32>
    %c0_10 = arith.constant 0 : index
    %c0_11 = arith.constant 0 : index
    %14 = vector.load %arg5[%c0_10, %c0_11] : memref<1x256xf32, #tpu.memory_space<vmem>>, vector<1x256xf32>
    %15 = vector.broadcast %7 : vector<8x1xf32> to vector<8x256xf32>
    %16 = vector.broadcast %14 : vector<1x256xf32> to vector<8x256xf32>
    %17 = arith.mulf %15, %16 : vector<8x256xf32>
    %18 = arith.truncf %13 : vector<8x7xf32> to vector<8x7xbf16>
    %c0_12 = arith.constant 0 : index
    %c0_13 = arith.constant 0 : index
    %19 = vector.load %arg6[%c0_12, %c0_13] : memref<7x256xbf16, #tpu.memory_space<vmem>>, vector<7x256xbf16>
    %cst = arith.constant dense<0.000000e+00> : vector<8x256xf32>
    %20 = tpu.matmul %18, %19, %cst {dimension_numbers = #tpu.dot_dimension_numbers<[1], [0], [0], [1], [0, 0, 1, 1], [], []>} : vector<8x7xbf16>, vector<7x256xbf16>, vector<8x256xf32> -> vector<8x256xf32>
    %21 = arith.addf %17, %20 : vector<8x256xf32>
    %c0_14 = arith.constant 0 : index
    %c0_15 = arith.constant 0 : index
    %22 = vector.load %arg7[%c0_14, %c0_15] : memref<1x256xf32, #tpu.memory_space<vmem>>, vector<1x256xf32>
    %23 = vector.broadcast %22 : vector<1x256xf32> to vector<8x256xf32>
    %24 = arith.addf %21, %23 : vector<8x256xf32>
    %cst_16 = arith.constant 0.000000e+00 : f32
    %25 = vector.broadcast %cst_16 : f32 to vector<8x256xf32>
    %26 = arith.maximumf %24, %25 : vector<8x256xf32>
    %27 = arith.truncf %26 : vector<8x256xf32> to vector<8x256xbf16>
    %c0_17 = arith.constant 0 : index
    %c0_18 = arith.constant 0 : index
    %28 = vector.load %arg8[%c0_17, %c0_18] : memref<256x256xbf16, #tpu.memory_space<vmem>>, vector<256x256xbf16>
    %cst_19 = arith.constant dense<0.000000e+00> : vector<8x256xf32>
    %29 = tpu.matmul %27, %28, %cst_19 {dimension_numbers = #tpu.dot_dimension_numbers<[1], [0], [0], [1], [0, 0, 1, 1], [], []>} : vector<8x256xbf16>, vector<256x256xbf16>, vector<8x256xf32> -> vector<8x256xf32>
    %c0_20 = arith.constant 0 : index
    %c0_21 = arith.constant 0 : index
    %30 = vector.load %arg9[%c0_20, %c0_21] : memref<1x256xf32, #tpu.memory_space<vmem>>, vector<1x256xf32>
    %31 = vector.broadcast %30 : vector<1x256xf32> to vector<8x256xf32>
    %32 = arith.addf %29, %31 : vector<8x256xf32>
    %cst_22 = arith.constant 0.000000e+00 : f32
    %33 = vector.broadcast %cst_22 : f32 to vector<8x256xf32>
    %34 = arith.maximumf %32, %33 : vector<8x256xf32>
    %c0_23 = arith.constant 0 : index
    %c0_24 = arith.constant 0 : index
    %35 = vector.load %arg10[%c0_23, %c0_24] : memref<1x256xf32, #tpu.memory_space<vmem>>, vector<1x256xf32>
    %cst_25 = arith.constant dense<0.000000e+00> : vector<1x8xf32>
    %36 = tpu.matmul %35, %34, %cst_25 {dimension_numbers = #tpu.dot_dimension_numbers<[1], [1], [0], [0], [0, 0, 1, 0], [], []>} : vector<1x256xf32>, vector<8x256xf32>, vector<1x8xf32> -> vector<1x8xf32>
    %c0_26 = arith.constant 0 : index
    %c0_27 = arith.constant 0 : index
    %37 = memref.load %arg11[%c0_26, %c0_27] : memref<1x1xf32, #tpu.memory_space<smem>>
    %38 = vector.broadcast %37 : f32 to vector<1x8xf32>
    %39 = arith.addf %36, %38 : vector<1x8xf32>
    %c0_28 = arith.constant 0 : index
    %c0_29 = arith.constant 0 : index
    %40 = vector.load %arg12[%c0_28, %c0_29] : memref<1x8xf32, #tpu.memory_space<vmem>>, vector<1x8xf32>
    tpu.vector_store %arg12[%c0_28, %c0_29], %39 {strides = array<i32>} : memref<1x8xf32, #tpu.memory_space<vmem>>, vector<1x8xf32>,
    return
  }
  func.func @transform_0(%arg0: i32) -> (i32, i32) {
    %c0_i32 = arith.constant 0 : i32
    %c0_i32_0 = arith.constant 0 : i32
    return %arg0, %c0_i32 : i32, i32
  }
  func.func @transform_1(%arg0: i32) -> (i32, i32) {
    %c0_i32 = arith.constant 0 : i32
    %c0_i32_0 = arith.constant 0 : i32
    return %arg0, %c0_i32 : i32, i32
  }
  func.func @transform_2(%arg0: i32) -> (i32, i32) {
    %c0_i32 = arith.constant 0 : i32
    %c0_i32_0 = arith.constant 0 : i32
    %c0_i32_1 = arith.constant 0 : i32
    return %c0_i32, %c0_i32_0 : i32, i32
  }
  func.func @transform_3(%arg0: i32) -> (i32, i32) {
    %c0_i32 = arith.constant 0 : i32
    %c0_i32_0 = arith.constant 0 : i32
    %c0_i32_1 = arith.constant 0 : i32
    return %c0_i32, %c0_i32_0 : i32, i32
  }
  func.func @transform_4(%arg0: i32) -> (i32, i32) {
    %c0_i32 = arith.constant 0 : i32
    %c0_i32_0 = arith.constant 0 : i32
    %c0_i32_1 = arith.constant 0 : i32
    return %c0_i32, %c0_i32_0 : i32, i32
  }
  func.func @transform_5(%arg0: i32) -> (i32, i32) {
    %c0_i32 = arith.constant 0 : i32
    %c0_i32_0 = arith.constant 0 : i32
    %c0_i32_1 = arith.constant 0 : i32
    return %c0_i32, %c0_i32_0 : i32, i32
  }
  func.func @transform_6(%arg0: i32) -> (i32, i32) {
    %c0_i32 = arith.constant 0 : i32
    %c0_i32_0 = arith.constant 0 : i32
    %c0_i32_1 = arith.constant 0 : i32
    return %c0_i32, %c0_i32_0 : i32, i32
  }
  func.func @transform_7(%arg0: i32) -> (i32, i32) {
    %c0_i32 = arith.constant 0 : i32
    %c0_i32_0 = arith.constant 0 : i32
    %c0_i32_1 = arith.constant 0 : i32
    return %c0_i32, %c0_i32_0 : i32, i32
  }
  func.func @transform_8(%arg0: i32) -> (i32, i32) {
    %c0_i32 = arith.constant 0 : i32
    %c0_i32_0 = arith.constant 0 : i32
    %c0_i32_1 = arith.constant 0 : i32
    return %c0_i32, %c0_i32_0 : i32, i32
  }
  func.func @transform_9(%arg0: i32) -> (i32, i32) {
    %c0_i32 = arith.constant 0 : i32
    %c0_i32_0 = arith.constant 0 : i32
    %c0_i32_1 = arith.constant 0 : i32
    return %c0_i32, %c0_i32_0 : i32, i32
  }
  func.func @transform_10(%arg0: i32) -> (i32, i32) {
    %c0_i32 = arith.constant 0 : i32
    %c0_i32_0 = arith.constant 0 : i32
    %c0_i32_1 = arith.constant 0 : i32
    return %c0_i32, %c0_i32_0 : i32, i32
  }
  func.func @transform_11(%arg0: i32) -> (i32, i32) {
    %c0_i32 = arith.constant 0 : i32
    %c0_i32_0 = arith.constant 0 : i32
    return %c0_i32, %arg0 : i32, i32
  }
}

</mosaic_0001>

<llo_original>
// kernel: vnetwork_forward.1
$region0: #{vnetwork_forward.1}
  #allocation0 [shape = 'u32[]', space=smem, size = 0x4, offset = 0x4, fixed_abs, tag = 'smem constant byte address 0x4 - core index']
  #allocation1 [shape = 'u32[72,128]{1,0:T(1,128)}', space=vmem, size = 0x9000, scoped, tag = 'internal scratch']
  #allocation2 [shape = 'f32[1,1]{1,0:T(1,128)S(6)}', space=smem, size = 0x200, scoped, tag = 'scoped memory for vnetwork_forward.1']
  %s0 = inlined_call_operand.vmem [shape: f32[8,1], index: 0, kind: input, shape index: {}]
  %s1 = inlined_call_operand.vmem [shape: f32[8,7], index: 1, kind: input, shape index: {}]
  %s2 = inlined_call_operand.vmem [shape: f32[1,2], index: 2, kind: input, shape index: {}]
  %s3 = inlined_call_operand.vmem [shape: f32[2,7], index: 3, kind: input, shape index: {}]
  %s4 = inlined_call_operand.vmem [shape: f32[1,256], index: 4, kind: input, shape index: {}]
  %s5 = inlined_call_operand.vmem [shape: bf16[7,256], index: 5, kind: input, shape index: {}]
  %s6 = inlined_call_operand.vmem [shape: f32[1,256], index: 6, kind: input, shape index: {}]
  %s7 = inlined_call_operand.hbm [shape: bf16[256,256], index: 7, kind: input, shape index: {}]
  %s8 = inlined_call_operand.vmem [shape: f32[1,256], index: 8, kind: input, shape index: {}]
  %s9 = inlined_call_operand.vmem [shape: f32[1,256], index: 9, kind: input, shape index: {}]
  %s10 = inlined_call_operand.<no memory space> [shape: f32[1,1], index: 10, kind: input, shape index: {}]
  %s11 = inlined_call_operand.hbm [shape: f32[1,8], index: 11, kind: output, shape index: {}]
  %s12 = sld [smem:[#allocation0]]
  $region62: #{vnetwork_forward.1} parent=0
    _
  %s14 = ssub.s32 1, %s12
  %s15 = scalar_select 0, %s14, %s12
  %16 = sst [smem:[#allocation2]] %s10
  $region1: #{vnetwork_forward.1} parent=0
    #allocation3 [shape = 'u8[512]{0}', space=smem, size = 0x200, scoped, tag = 'input window, operand 2, single buffered']
    #allocation4 [shape = 's32[1]{0}', space=sflag, size = 0x4, scoped, tag = 'scoped memory for vnetwork_forward.1']
    #allocation5 [shape = 's32[1]{0}', space=sflag, size = 0x4, scoped, tag = 'scoped memory for vnetwork_forward.1']
    #allocation6 [shape = 's32[1]{0}', space=sflag, size = 0x4, scoped, tag = 'scoped memory for vnetwork_forward.1']
    #allocation7 [shape = 'u8[131072]{0}', space=vmem, size = 0x20000, scoped, tag = 'input window, operand 7, single buffered']
    #allocation8 [shape = 'u8[512]{0}', space=vmem, size = 0x400, scoped, tag = 'output window, operand 0, single buffered']
    %17 = vsyncpa [#allocation6], 0
    %18 = vsyncpa [#allocation4], 0
    %19 = vsyncpa [#allocation5], 0
    // Predicated region
    $region2: #{vnetwork_forward.1} parent=1 // pred_check
      _
    $region3: #{vnetwork_forward.1} parent=1 // pred_check_branch
      %21 = sbr.rel (0) target = $region5
    $region4: #{vnetwork_forward.1} parent=1 // pred_region
      _
    $region5: #{vnetwork_forward.1} parent=1 // pred_fallthru
      _
    // Predicated region
    $region6: #{vnetwork_forward.1} parent=1 // pred_check
      _
    $region7: #{vnetwork_forward.1} parent=1 // pred_check_branch
      %23 = sbr.rel (0) target = $region9
    $region8: #{vnetwork_forward.1} parent=1 // pred_region
      _
    $region9: #{vnetwork_forward.1} parent=1 // pred_fallthru
      _
    // Predicated region
    $region10: #{vnetwork_forward.1} parent=1 // pred_check
      _
    $region11: #{vnetwork_forward.1} parent=1 // pred_check_branch
      %25 = sbr.rel (0) target = $region13
    $region12: #{vnetwork_forward.1} parent=1 // pred_region
      %27 = vsyncadd [#allocation6], 0
      %s29 = sshll.u32 %s2, 4
      %s30 = int_to_ptr.vmem [resolvable:$true] %s29
      %32 = dma.vmem_to_smem %s30, 16, [#allocation3], [#allocation6]
    $region13: #{vnetwork_forward.1} parent=1 // pred_fallthru
      _
    // Predicated region
    $region14: #{vnetwork_forward.1} parent=1 // pred_check
      _
    $region15: #{vnetwork_forward.1} parent=1 // pred_check_branch
      %34 = sbr.rel (0) target = $region17
    $region16: #{vnetwork_forward.1} parent=1 // pred_region
      _
    $region17: #{vnetwork_forward.1} parent=1 // pred_fallthru
      _
    // Predicated region
    $region18: #{vnetwork_forward.1} parent=1 // pred_check
      _
    $region19: #{vnetwork_forward.1} parent=1 // pred_check_branch
      %36 = sbr.rel (0) target = $region21
    $region20: #{vnetwork_forward.1} parent=1 // pred_region
      _
    $region21: #{vnetwork_forward.1} parent=1 // pred_fallthru
      _
    // Predicated region
    $region22: #{vnetwork_forward.1} parent=1 // pred_check
      _
    $region23: #{vnetwork_forward.1} parent=1 // pred_check_branch
      %38 = sbr.rel (0) target = $region25
    $region24: #{vnetwork_forward.1} parent=1 // pred_region
      _
    $region25: #{vnetwork_forward.1} parent=1 // pred_fallthru
      _
    // Predicated region
    $region26: #{vnetwork_forward.1} parent=1 // pred_check
      _
    $region27: #{vnetwork_forward.1} parent=1 // pred_check_branch
      %40 = sbr.rel (0) target = $region29
    $region28: #{vnetwork_forward.1} parent=1 // pred_region
      _
    $region29: #{vnetwork_forward.1} parent=1 // pred_fallthru
      _
    // Predicated region
    $region30: #{vnetwork_forward.1} parent=1 // pred_check
      _
    $region31: #{vnetwork_forward.1} parent=1 // pred_check_branch
      %42 = sbr.rel (0) target = $region33
    $region32: #{vnetwork_forward.1} parent=1 // pred_region
      %44 = vsyncadd [#allocation4], 0
      %s45 = sshll.u32 %s7, 4
      %s46 = int_to_ptr.hbm [resolvable:$true] %s45
      %s47 = sshll.u32 [#allocation7], 4
      %s48 = int_to_ptr.vmem [resolvable:$true] %s47
      %53 = dma.hbm_to_vmem [thread:$0]  %s46, 4096, %s48, [#allocation4], 128, 128, 8
    $region33: #{vnetwork_forward.1} parent=1 // pred_fallthru
      _
    // Predicated region
    $region34: #{vnetwork_forward.1} parent=1 // pred_check
      _
    $region35: #{vnetwork_forward.1} parent=1 // pred_check_branch
      %55 = sbr.rel (0) target = $region37
    $region36: #{vnetwork_forward.1} parent=1 // pred_region
      _
    $region37: #{vnetwork_forward.1} parent=1 // pred_fallthru
      _
    // Predicated region
    $region38: #{vnetwork_forward.1} parent=1 // pred_check
      _
    $region39: #{vnetwork_forward.1} parent=1 // pred_check_branch
      %57 = sbr.rel (0) target = $region41
    $region40: #{vnetwork_forward.1} parent=1 // pred_region
      _
    $region41: #{vnetwork_forward.1} parent=1 // pred_fallthru
      _
    // Predicated region
    $region42: #{vnetwork_forward.1} parent=1 // pred_check
      _
    $region43: #{vnetwork_forward.1} parent=1 // pred_check_branch
      %59 = sbr.rel (0) target = $region45
    $region44: #{vnetwork_forward.1} parent=1 // pred_region
      _
    $region45: #{vnetwork_forward.1} parent=1 // pred_fallthru
      _
    // Predicated region
    $region46: #{vnetwork_forward.1} parent=1 // pred_check
      _
    $region47: #{vnetwork_forward.1} parent=1 // pred_check_branch
      %61 = sbr.rel (0) target = $region49
    $region48: #{vnetwork_forward.1} parent=1 // pred_region
      %63 = dma.done [#allocation6], 16
    $region49: #{vnetwork_forward.1} parent=1 // pred_fallthru
      _
    // Predicated region
    $region50: #{vnetwork_forward.1} parent=1 // pred_check
      _
    $region51: #{vnetwork_forward.1} parent=1 // pred_check_branch
      %65 = sbr.rel (0) target = $region53
    $region52: #{vnetwork_forward.1} parent=1 // pred_region
      %67 = dma.done [#allocation4], 4096
    $region53: #{vnetwork_forward.1} parent=1 // pred_fallthru
      _
    %68 = sfence
    %v70 = vld [vmem:[%s0] sm:$0xff]
    %v71 = vld [vmem:[%s1] sm:$0xff]
    %s72 = sld [smem:[#allocation3]]
    %v73 = vstv %s72
    %v74 = vsub.f32 %v70, %v73
    %s75 = sld [smem:[#allocation3 + $0x1]]
    %v76 = vstv %s75
    %v77 = vmul.f32 %v74, %v76
    %v78 = vld [vmem:[%s3] sm:$0x1]
    %v79 = vperm.slane %v78, 0
    %v80 = vsub.f32 %v71, %v79
    %v81 = vld [vmem:[%s3 + $0x1] sm:$0x1]
    %v82 = vperm.slane %v81, 0
    %v83 = vmul.f32 %v80, %v82
    %v84 = vld [vmem:[%s4] sm:$0x3]
    %86 = vset.pattern.permute.xlu0 0
    %87 = vperm.xlu0 %86, %v77
    %v88 = vpop.permute.xlu0 %87
    %v91 = vperm.slane %v84, 0
    %v92 = vperm.slane %v84, 1
    %v95 = vmul.f32 %v88, %v91
    %v96 = vmul.f32 %v88, %v92
    %v97 = vpack.c.bf16 %v83, %v83
    %v98 = vld [vmem:[%s5] sm:$0xff]
    %v100 = vunpack.c.l.b16 %v98
    %v101 = vunpack.c.h.b16 %v98
    %v102 = vpack.c.b16 %v100, %v100
    %v103 = vpack.c.b16 %v101, %v101
    %vm104 = vcmask 56320
    %v106 = vsel %vm104, %v97, 0
    %vm108 = vcmask 1042432
    %vm109 = vcmask 1043456
    %v110 = vsel %vm108, 4294967295, 65535
    %v111 = vsel %vm109, %v110, 0
    %v113 = vand.u32 %v102, %v111
    %v116 = vand.u32 %v103, %v111
    %118 = vmatpush.bf16.msra.mxu0 0
    %119 = vmatpush.bf16.msra.mxu0 0
    %120 = vmatpush.bf16.msra.mxu0 0
    %121 = vmatpush.bf16.msra.mxu0 0
    %122 = vmatpush.bf16.msra.mxu0 0
    %123 = vmatpush.bf16.msra.mxu0 0
    %124 = vmatpush.bf16.msra.mxu0 0
    %125 = vmatpush.bf16.msra.mxu0 %v113
    %126 = vmatmul.bf16.gmra.mxu0 %v106
    %v127 = vpop.f32.mrf.mxu0
    %v128 = vadd.f32 0.0, %v127
    %v129 = vpop.f32.mrf.mxu0
    %130 = vdwg.mxu0
    %131 = vmatpush.bf16.msra.mxu0 0
    %132 = vmatpush.bf16.msra.mxu0 0
    %133 = vmatpush.bf16.msra.mxu0 0
    %134 = vmatpush.bf16.msra.mxu0 0
    %135 = vmatpush.bf16.msra.mxu0 0
    %136 = vmatpush.bf16.msra.mxu0 0
    %137 = vmatpush.bf16.msra.mxu0 0
    %138 = vmatpush.bf16.msra.mxu0 %v116
    %139 = vmatmul.bf16.gmra.mxu0 %v106
    %v140 = vpop.f32.mrf.mxu0
    %v141 = vadd.f32 0.0, %v140
    %v142 = vpop.f32.mrf.mxu0
    %143 = vdwg.mxu0
    %v144 = vadd.f32 %v95, %v128
    %v145 = vadd.f32 %v96, %v141
    %v146 = vld [vmem:[%s6] sm:$0x3]
    %v148 = vperm.slane %v146, 0
    %v149 = vperm.slane %v146, 1
    %v152 = vadd.f32 %v144, %v148
    %v153 = vadd.f32 %v145, %v149
    %v154 = vmax.f32 %v152, 0.0
    %v155 = vmax.f32 %v153, 0.0
    %v156 = vpack.c.bf16 %v154, %v154
    %v157 = vpack.c.bf16 %v155, %v155
    %v158 = vld [vmem:[#allocation7] sm:$0xff]
    %v159 = vld [vmem:[#allocation7 + $0x8] sm:$0xff]
    %v160 = vld [vmem:[#allocation7 + $0x10] sm:$0xff]
    %v161 = vld [vmem:[#allocation7 + $0x18] sm:$0xff]
    %v162 = vld [vmem:[#allocation7 + $0x20] sm:$0xff]
    %v163 = vld [vmem:[#allocation7 + $0x28] sm:$0xff]
    %v164 = vld [vmem:[#allocation7 + $0x30] sm:$0xff]
    %v165 = vld [vmem:[#allocation7 + $0x38] sm:$0xff]
    %v166 = vld [vmem:[#allocation7 + $0x40] sm:$0xff]
    %v167 = vld [vmem:[#allocation7 + $0x48] sm:$0xff]
    %v168 = vld [vmem:[#allocation7 + $0x50] sm:$0xff]
    %v169 = vld [vmem:[#allocation7 + $0x58] sm:$0xff]
    %v170 = vld [vmem:[#allocation7 + $0x60] sm:$0xff]
    %v171 = vld [vmem:[#allocation7 + $0x68] sm:$0xff]
    %v172 = vld [vmem:[#allocation7 + $0x70] sm:$0xff]
    %v173 = vld [vmem:[#allocation7 + $0x78] sm:$0xff]
    %v174 = vld [vmem:[#allocation7 + $0x80] sm:$0xff]
    %v175 = vld [vmem:[#allocation7 + $0x88] sm:$0xff]
    %v176 = vld [vmem:[#allocation7 + $0x90] sm:$0xff]
    %v177 = vld [vmem:[#allocation7 + $0x98] sm:$0xff]
    %v178 = vld [vmem:[#allocation7 + $0xa0] sm:$0xff]
    %v179 = vld [vmem:[#allocation7 + $0xa8] sm:$0xff]
    %v180 = vld [vmem:[#allocation7 + $0xb0] sm:$0xff]
    %v181 = vld [vmem:[#allocation7 + $0xb8] sm:$0xff]
    %v182 = vld [vmem:[#allocation7 + $0xc0] sm:$0xff]
    %v183 = vld [vmem:[#allocation7 + $0xc8] sm:$0xff]
    %v184 = vld [vmem:[#allocation7 + $0xd0] sm:$0xff]
    %v185 = vld [vmem:[#allocation7 + $0xd8] sm:$0xff]
    %v186 = vld [vmem:[#allocation7 + $0xe0] sm:$0xff]
    %v187 = vld [vmem:[#allocation7 + $0xe8] sm:$0xff]
    %v188 = vld [vmem:[#allocation7 + $0xf0] sm:$0xff]
    %v189 = vld [vmem:[#allocation7 + $0xf8] sm:$0xff]
    %v190 = vld [vmem:[%s8] sm:$0x3]
    %v192 = vperm.slane %v190, 0
    %v193 = vperm.slane %v190, 1
    %v228 = vunpack.c.l.b16 %v158
    %v229 = vunpack.c.h.b16 %v158
    %v230 = vunpack.c.l.b16 %v159
    %v231 = vunpack.c.h.b16 %v159
    %v232 = vunpack.c.l.b16 %v160
    %v233 = vunpack.c.h.b16 %v160
    %v234 = vunpack.c.l.b16 %v161
    %v235 = vunpack.c.h.b16 %v161
    %v236 = vunpack.c.l.b16 %v162
    %v237 = vunpack.c.h.b16 %v162
    %v238 = vunpack.c.l.b16 %v163
    %v239 = vunpack.c.h.b16 %v163
    %v240 = vunpack.c.l.b16 %v164
    %v241 = vunpack.c.h.b16 %v164
    %v242 = vunpack.c.l.b16 %v165
    %v243 = vunpack.c.h.b16 %v165
    %v244 = vunpack.c.l.b16 %v166
    %v245 = vunpack.c.h.b16 %v166
    %v246 = vunpack.c.l.b16 %v167
    %v247 = vunpack.c.h.b16 %v167
    %v248 = vunpack.c.l.b16 %v168
    %v249 = vunpack.c.h.b16 %v168
    %v250 = vunpack.c.l.b16 %v169
    %v251 = vunpack.c.h.b16 %v169
    %v252 = vunpack.c.l.b16 %v170
    %v253 = vunpack.c.h.b16 %v170
    %v254 = vunpack.c.l.b16 %v171
    %v255 = vunpack.c.h.b16 %v171
    %v256 = vunpack.c.l.b16 %v172
    %v257 = vunpack.c.h.b16 %v172
    %v258 = vunpack.c.l.b16 %v173
    %v259 = vunpack.c.h.b16 %v173
    %v260 = vunpack.c.l.b16 %v174
    %v261 = vunpack.c.h.b16 %v174
    %v262 = vunpack.c.l.b16 %v175
    %v263 = vunpack.c.h.b16 %v175
    %v264 = vunpack.c.l.b16 %v176
    %v265 = vunpack.c.h.b16 %v176
    %v266 = vunpack.c.l.b16 %v177
    %v267 = vunpack.c.h.b16 %v177
    %v268 = vunpack.c.l.b16 %v178
    %v269 = vunpack.c.h.b16 %v178
    %v270 = vunpack.c.l.b16 %v179
    %v271 = vunpack.c.h.b16 %v179
    %v272 = vunpack.c.l.b16 %v180
    %v273 = vunpack.c.h.b16 %v180
    %v274 = vunpack.c.l.b16 %v181
    %v275 = vunpack.c.h.b16 %v181
    %v276 = vunpack.c.l.b16 %v182
    %v277 = vunpack.c.h.b16 %v182
    %v278 = vunpack.c.l.b16 %v183
    %v279 = vunpack.c.h.b16 %v183
    %v280 = vunpack.c.l.b16 %v184
    %v281 = vunpack.c.h.b16 %v184
    %v282 = vunpack.c.l.b16 %v185
    %v283 = vunpack.c.h.b16 %v185
    %v284 = vunpack.c.l.b16 %v186
    %v285 = vunpack.c.h.b16 %v186
    %v286 = vunpack.c.l.b16 %v187
    %v287 = vunpack.c.h.b16 %v187
    %v288 = vunpack.c.l.b16 %v188
    %v289 = vunpack.c.h.b16 %v188
    %v290 = vunpack.c.l.b16 %v189
    %v291 = vunpack.c.h.b16 %v189
    %v292 = vpack.c.b16 %v230, %v228
    %v293 = vpack.c.b16 %v231, %v229
    %v294 = vpack.c.b16 %v234, %v232
    %v295 = vpack.c.b16 %v235, %v233
    %v296 = vpack.c.b16 %v238, %v236
    %v297 = vpack.c.b16 %v239, %v237
    %v298 = vpack.c.b16 %v242, %v240
    %v299 = vpack.c.b16 %v243, %v241
    %v300 = vpack.c.b16 %v246, %v244
    %v301 = vpack.c.b16 %v247, %v245
    %v302 = vpack.c.b16 %v250, %v248
    %v303 = vpack.c.b16 %v251, %v249
    %v304 = vpack.c.b16 %v254, %v252
    %v305 = vpack.c.b16 %v255, %v253
    %v306 = vpack.c.b16 %v258, %v256
    %v307 = vpack.c.b16 %v259, %v257
    %v308 = vpack.c.b16 %v262, %v260
    %v309 = vpack.c.b16 %v263, %v261
    %v310 = vpack.c.b16 %v266, %v264
    %v311 = vpack.c.b16 %v267, %v265
    %v312 = vpack.c.b16 %v270, %v268
    %v313 = vpack.c.b16 %v271, %v269
    %v314 = vpack.c.b16 %v274, %v272
    %v315 = vpack.c.b16 %v275, %v273
    %v316 = vpack.c.b16 %v278, %v276
    %v317 = vpack.c.b16 %v279, %v277
    %v318 = vpack.c.b16 %v282, %v280
    %v319 = vpack.c.b16 %v283, %v281
    %v320 = vpack.c.b16 %v286, %v284
    %v321 = vpack.c.b16 %v287, %v285
    %v322 = vpack.c.b16 %v290, %v288
    %v323 = vpack.c.b16 %v291, %v289
    %356 = vmatpush.bf16.msra.mxu0 %v306
    %357 = vmatpush.bf16.msra.mxu0 %v304
    %358 = vmatpush.bf16.msra.mxu0 %v302
    %359 = vmatpush.bf16.msra.mxu0 %v300
    %360 = vmatpush.bf16.msra.mxu0 %v298
    %361 = vmatpush.bf16.msra.mxu0 %v296
    %362 = vmatpush.bf16.msra.mxu0 %v294
    %363 = vmatpush.bf16.msra.mxu0 %v292
    %364 = vmatmul.bf16.gmra.mxu0 %v156
    %v365 = vpop.f32.mrf.mxu0
    %v366 = vadd.f32 %v192, %v365
    %v367 = vpop.f32.mrf.mxu0
    %368 = vdwg.mxu0
    %369 = vmatpush.bf16.msra.mxu0 %v322
    %370 = vmatpush.bf16.msra.mxu0 %v320
    %371 = vmatpush.bf16.msra.mxu0 %v318
    %372 = vmatpush.bf16.msra.mxu0 %v316
    %373 = vmatpush.bf16.msra.mxu0 %v314
    %374 = vmatpush.bf16.msra.mxu0 %v312
    %375 = vmatpush.bf16.msra.mxu0 %v310
    %376 = vmatpush.bf16.msra.mxu0 %v308
    %377 = vmatmul.bf16.gmra.mxu0 %v157
    %v378 = vpop.f32.mrf.mxu0
    %v379 = vadd.f32 %v366, %v378
    %v380 = vpop.f32.mrf.mxu0
    %381 = vdwg.mxu0
    %382 = vmatpush.bf16.msra.mxu0 %v307
    %383 = vmatpush.bf16.msra.mxu0 %v305
    %384 = vmatpush.bf16.msra.mxu0 %v303
    %385 = vmatpush.bf16.msra.mxu0 %v301
    %386 = vmatpush.bf16.msra.mxu0 %v299
    %387 = vmatpush.bf16.msra.mxu0 %v297
    %388 = vmatpush.bf16.msra.mxu0 %v295
    %389 = vmatpush.bf16.msra.mxu0 %v293
    %390 = vmatmul.bf16.gmra.mxu0 %v156
    %v391 = vpop.f32.mrf.mxu0
    %v392 = vadd.f32 %v193, %v391
    %v393 = vpop.f32.mrf.mxu0
    %394 = vdwg.mxu0
    %395 = vmatpush.bf16.msra.mxu0 %v323
    %396 = vmatpush.bf16.msra.mxu0 %v321
    %397 = vmatpush.bf16.msra.mxu0 %v319
    %398 = vmatpush.bf16.msra.mxu0 %v317
    %399 = vmatpush.bf16.msra.mxu0 %v315
    %400 = vmatpush.bf16.msra.mxu0 %v313
    %401 = vmatpush.bf16.msra.mxu0 %v311
    %402 = vmatpush.bf16.msra.mxu0 %v309
    %403 = vmatmul.bf16.gmra.mxu0 %v157
    %v404 = vpop.f32.mrf.mxu0
    %v405 = vadd.f32 %v392, %v404
    %v406 = vpop.f32.mrf.mxu0
    %407 = vdwg.mxu0
    %v408 = vmax.f32 %v379, 0.0
    %v409 = vmax.f32 %v405, 0.0
    %v410 = vld [vmem:[%s9] sm:$0x3]
    %s411 = sld [smem:[#allocation2]]
    %v412 = vstv %s411
    %v414 = vperm.slane %v410, 0
    %v415 = vperm.slane %v410, 1
    %418 = vmatpush.xpose.msra.mxu0 0.0
    %419 = vmatpush.xpose.msra.mxu0 0.0
    %420 = vmatpush.xpose.msra.mxu0 0.0
    %421 = vmatpush.xpose.msra.mxu0 0.0
    %422 = vmatpush.xpose.msra.mxu0 0.0
    %423 = vmatpush.xpose.msra.mxu0 0.0
    %424 = vmatpush.xpose.msra.mxu0 0.0
    %425 = vmatpush.xpose.msra.mxu0 0.0
    %426 = vmatpush.xpose.msra.mxu0 0.0
    %427 = vmatpush.xpose.msra.mxu0 0.0
    %428 = vmatpush.xpose.msra.mxu0 0.0
    %429 = vmatpush.xpose.msra.mxu0 0.0
    %430 = vmatpush.xpose.msra.mxu0 0.0
    %431 = vmatpush.xpose.msra.mxu0 0.0
    %432 = vmatpush.xpose.msra.mxu0 0.0
    %433 = vmatpush.xpose.msra.mxu0 %v408
    %434 = vmatmul.f32.gmra.mxu0 %v414
    %v435 = vpop.f32.mrf.mxu0
    %v436 = vadd.f32 %v412, %v435
    %437 = vdwg.mxu0
    %438 = vmatpush.xpose.msra.mxu0 0.0
    %439 = vmatpush.xpose.msra.mxu0 0.0
    %440 = vmatpush.xpose.msra.mxu0 0.0
    %441 = vmatpush.xpose.msra.mxu0 0.0
    %442 = vmatpush.xpose.msra.mxu0 0.0
    %443 = vmatpush.xpose.msra.mxu0 0.0
    %444 = vmatpush.xpose.msra.mxu0 0.0
    %445 = vmatpush.xpose.msra.mxu0 0.0
    %446 = vmatpush.xpose.msra.mxu0 0.0
    %447 = vmatpush.xpose.msra.mxu0 0.0
    %448 = vmatpush.xpose.msra.mxu0 0.0
    %449 = vmatpush.xpose.msra.mxu0 0.0
    %450 = vmatpush.xpose.msra.mxu0 0.0
    %451 = vmatpush.xpose.msra.mxu0 0.0
    %452 = vmatpush.xpose.msra.mxu0 0.0
    %453 = vmatpush.xpose.msra.mxu0 %v409
    %454 = vmatmul.f32.gmra.mxu0 %v415
    %v455 = vpop.f32.mrf.mxu0
    %v456 = vadd.f32 %v436, %v455
    %457 = vdwg.mxu0
    %vm458 = vcmask 57344
    %459 = vst.msk [vmem:[#allocation8] sm:$0x1] %vm458, %v456
    // Predicated region
    $region54: #{vnetwork_forward.1} parent=1 // pred_check
      _
    $region55: #{vnetwork_forward.1} parent=1 // pred_check_branch
      %461 = sbr.rel (0) target = $region57
    $region56: #{vnetwork_forward.1} parent=1 // pred_region
      %463 = vsyncadd [#allocation5], 0
      %s465 = sshll.u32 [#allocation8], 4
      %s466 = int_to_ptr.vmem [resolvable:$true] %s465
      %s467 = sshll.u32 %s11, 4
      %s468 = int_to_ptr.hbm [resolvable:$true] %s467
      %470 = dma.vmem_to_hbm [thread:$0]  %s466, 16, %s468, [#allocation5]
    $region57: #{vnetwork_forward.1} parent=1 // pred_fallthru
      _
    // Predicated region
    $region58: #{vnetwork_forward.1} parent=1 // pred_check
      _
    $region59: #{vnetwork_forward.1} parent=1 // pred_check_branch
      %472 = sbr.rel (0) target = $region61
    $region60: #{vnetwork_forward.1} parent=1 // pred_region
      %474 = dma.done [#allocation5], 16
    $region61: #{vnetwork_forward.1} parent=1 // pred_fallthru
      _
    %475 = vsyncpa [#allocation4], 1
    %476 = vsyncpa [#allocation5], 1
    %477 = vsyncpa [#allocation6], 1

</llo_original>
